<compile_context>
chip_gen: v7x
topology: tpu7x:2x2x1
jax: 0.10.0
libtpu: 0.0.40
codegen_flags: <defaults>
</compile_context>

<pallas_src>
import functools

import jax
import jax.numpy as jnp
from jax.experimental import pallas as pl
from jax.experimental.pallas import tpu as pltpu


def _contour_loss_kernel(pred_ref, target_ref, len_out_ref, reg_out_ref,
                         len_acc, reg_acc, mask_scr, *, h):
    """One grid step = one (TB*H, W) block of stacked planes."""
    j = pl.program_id(1)
    rows, w = pred_ref.shape

    @pl.when(j == 0)
    def _init():
        len_acc[...] = jnp.zeros_like(len_acc)
        reg_acc[...] = jnp.zeros_like(reg_acc)
        # Rows whose +1/+2 neighbours would cross a stacked-plane boundary are
        # invalid for the length term. Build the 0/1 mask once per core so the
        # hot loop only pays one multiply (not iota + mod + cmp + select).
        row_id = jax.lax.broadcasted_iota(jnp.int32, (rows - 2, w - 2), 0)
        mask_scr[...] = jnp.where((row_id % h) < (h - 2),
                                  jnp.float32(1.0), jnp.float32(0.0))

    # Cast to f32 inside the kernel (inputs travel over HBM in native dtype).
    p = pred_ref[...].astype(jnp.float32)     # (rows, W)
    t = target_ref[...].astype(jnp.float32)   # (rows, W)

    # ---- length term: interior forward differences --------------------------
    #   dr[r, c] = p[r+2, c] - p[r+1, c]   (reference: pred[2:, :-2]-pred[1:-1, :-2])
    #   dc[r, c] = p[r, c+2] - p[r, c+1]   (reference: pred[:-2, 2:]-pred[:-2, 1:-1])
    dr = p[2:, : w - 2] - p[1:-1, : w - 2]            # (rows-2, W-2)
    dc = p[: rows - 2, 2:] - p[: rows - 2, 1:-1]      # (rows-2, W-2)
    delta = dr * dr + dc * dc                         # >= 0, abs() dropped
    len_acc[...] = len_acc[...] + mask_scr[...] * jnp.sqrt(delta + jnp.float32(1e-8))

    # ---- region terms (fused): p*(t-1)^2 + (1-p)*t^2 = p + t*(t - 2p) -------
    reg_acc[...] = reg_acc[...] + (p + t * (t - p - p))

    # ---- epilogue: single cross-lane reduce, one partial result per core ----
    @pl.when(j == pl.num_programs(1) - 1)
    def _finalize():
        len_out_ref[...] = jnp.full(len_out_ref.shape,
                                    jnp.sum(len_acc[...]), jnp.float32)
        reg_out_ref[...] = jnp.full(reg_out_ref.shape,
                                    jnp.sum(reg_acc[...]), jnp.float32)


def _pick_planes_per_block(n, h, w, bytes_per_in_elem, planes_per_block=None):
    """Largest divisor of n whose block fits a conservative VMEM budget."""
    if planes_per_block is not None:
        if n % planes_per_block != 0:
            raise ValueError("planes_per_block must divide B*C")
        if (planes_per_block * h) % 8 != 0 and planes_per_block != n:
            raise ValueError("planes_per_block*H must be a multiple of 8")
        return planes_per_block
    # Per plane resident bytes: 2 double-buffered inputs + 2 f32 accumulators
    # + 1 f32 mask scratch.
    per_plane = h * w * (2 * bytes_per_in_elem + 12)
    budget = 10 * 1024 * 1024         # conservative; fine on v5e/v6e/v7x
    divisors = [d for d in range(1, n + 1) if n % d == 0]
    legal = [d for d in divisors if (d * h) % 8 == 0 or d == n]
    fitting = [d for d in legal if d * per_plane <= budget]
    return max(fitting) if fitting else min(legal)


def contour_loss(pred, target, weight=10.0, planes_per_block=None):
    """Pallas implementation of ContourLoss.forward(pred, target, weight)."""
    B, C, H, W = pred.shape
    n = B * C

    # Stacked-plane 2-D view; dtypes are passed through unchanged (bf16 stays
    # bf16 over HBM, cast to f32 inside the kernel).
    p2 = pred.reshape(n * H, W)
    t2 = target.reshape(n * H, W)

    in_elem_bytes = p2.dtype.itemsize + t2.dtype.itemsize
    tb = _pick_planes_per_block(n, H, W, in_elem_bytes, planes_per_block)
    n_blocks = n // tb
    rows = tb * H

    # 2-way split of the block loop: sharded across TensorCores on v7x,
    # harmless (sequential) on single-core v5e/v6e.
    if n_blocks >= 2 and n_blocks % 2 == 0:
        split, steps = 2, n_blocks // 2
    else:
        split, steps = 1, n_blocks

    kernel = functools.partial(_contour_loss_kernel, h=H)

    cost = pl.CostEstimate(
        flops=12 * n * H * W,
        transcendentals=n * (H - 2) * (W - 2),
        bytes_accessed=n * H * W * in_elem_bytes + split * 2 * 8 * 128 * 4,
    )

    out_len, out_reg = pl.pallas_call(
        kernel,
        out_shape=(jax.ShapeDtypeStruct((split, 8, 128), jnp.float32),
                   jax.ShapeDtypeStruct((split, 8, 128), jnp.float32)),
        grid_spec=pltpu.PrefetchScalarGridSpec(
            num_scalar_prefetch=0,
            grid=(split, steps),
            in_specs=[
                pl.BlockSpec((rows, W), lambda c, j: (c * steps + j, 0)),
                pl.BlockSpec((rows, W), lambda c, j: (c * steps + j, 0)),
            ],
            out_specs=[
                pl.BlockSpec((1, 8, 128), lambda c, j: (c, 0, 0)),
                pl.BlockSpec((1, 8, 128), lambda c, j: (c, 0, 0)),
            ],
            scratch_shapes=[
                pltpu.VMEM((rows - 2, W - 2), jnp.float32),   # length partials
                pltpu.VMEM((rows, W), jnp.float32),           # region partials
                pltpu.VMEM((rows - 2, W - 2), jnp.float32),   # validity mask
            ],
        ),
        compiler_params=pltpu.CompilerParams(
            dimension_semantics=("parallel", "arbitrary"),
            vmem_limit_bytes=32 * 1024 * 1024,
        ),
        cost_estimate=cost,
    )(p2, t2)

    # Combine the (broadcast-filled) per-core partial sums and normalize.
    len_total = jnp.sum(out_len[:, 0, 0])
    reg_total = jnp.sum(out_reg[:, 0, 0])
    length = len_total / jnp.float32(n * (H - 2) * (W - 2))
    region = reg_total / jnp.float32(n * H * W)
    return jnp.float32(weight) * length + region


def _contour_loss_ref(pred, target, weight=10.0):
    """Pure-JAX reference mirroring the PyTorch module, for validation."""
    pred = pred.astype(jnp.float32)
    target = target.astype(jnp.float32)
    delta_r = pred[:, :, 1:, :] - pred[:, :, :-1, :]
    delta_c = pred[:, :, :, 1:] - pred[:, :, :, :-1]
    delta_r = delta_r[:, :, 1:, :-2] ** 2
    delta_c = delta_c[:, :, :-2, 1:] ** 2
    delta_pred = jnp.abs(delta_r + delta_c)
    length = jnp.mean(jnp.sqrt(delta_pred + 1e-08))
    region_in = jnp.mean(pred * (target - 1.0) ** 2)
    region_out = jnp.mean((1.0 - pred) * target ** 2)
    return weight * length + region_in + region_out


if __name__ == "__main__":
    key = jax.random.PRNGKey(0)
    k_pred, k_tgt = jax.random.split(key)

    B, C, H, W = 2, 4, 16, 16
    # pred: soft mask in [0, 1]; target: binary contour-region mask {0, 1}
    pred = jax.nn.sigmoid(jax.random.normal(k_pred, (B, C, H, W), jnp.float32))
    target = (jax.random.uniform(k_tgt, (B, C, H, W), jnp.float32) > 0.5
              ).astype(jnp.float32)

    ref = _contour_loss_ref(pred, target, weight=10.0)

    # Multi-block path: exercises init/accumulate/finalize and the 2-way
    # TensorCore split used on v7x (grid = (2, 2) here).
    loss_blocked = jax.block_until_ready(
        contour_loss(pred, target, weight=10.0, planes_per_block=2))
    assert jnp.allclose(loss_blocked, ref, rtol=1e-5, atol=1e-5), (loss_blocked, ref)

    # Auto-tiled path (one big block for this small test).
    loss_auto = jax.block_until_ready(contour_loss(pred, target, weight=10.0))
    assert jnp.allclose(loss_auto, ref, rtol=1e-5, atol=1e-5), (loss_auto, ref)

    print("KERNEL_OK")
</pallas_src>

<mosaic_0001>
module attributes {stable_mosaic.version = 11 : i64} {
  func.func @_contour_loss_kernel(%arg0: i32, %arg1: i32, %arg2: memref<32x16xf32, #tpu.memory_space<vmem>>, %arg3: memref<32x16xf32, #tpu.memory_space<vmem>>, %arg4: memref<1x8x128xf32, #tpu.memory_space<vmem>>, %arg5: memref<1x8x128xf32, #tpu.memory_space<vmem>>, %arg6: memref<30x14xf32, #tpu.memory_space<vmem>>, %arg7: memref<32x16xf32, #tpu.memory_space<vmem>>, %arg8: memref<30x14xf32, #tpu.memory_space<vmem>>) attributes {dimension_semantics = [#tpu.dimension_semantics<parallel>, #tpu.dimension_semantics<arbitrary>], iteration_bounds = array<i64: 2, 2>, scalar_prefetch = 0 : i64, scratch_operands = 3 : i64, tpu.core_type = #tpu.core_type<tc>, window_params = [{transform_indices = @transform_0, window_bounds = array<i64: 32, 16>}, {transform_indices = @transform_1, window_bounds = array<i64: 32, 16>}, {transform_indices = @transform_2, window_bounds = array<i64: 1, 8, 128>}, {transform_indices = @transform_3, window_bounds = array<i64: 1, 8, 128>}]} {
    %c0_i32 = arith.constant 0 : i32
    %0 = arith.cmpi eq, %arg1, %c0_i32 : i32
    %1 = arith.extui %0 : i1 to i32
    %c0_i32_0 = arith.constant 0 : i32
    %2 = arith.cmpi ne, %1, %c0_i32_0 : i32
    scf.if %2 {
      %cst_15 = arith.constant 0.000000e+00 : f32
      %32 = vector.broadcast %cst_15 : f32 to vector<30x14xf32>
      %c0_16 = arith.constant 0 : index
      %c0_17 = arith.constant 0 : index
      %33 = vector.load %arg6[%c0_16, %c0_17] : memref<30x14xf32, #tpu.memory_space<vmem>>, vector<30x14xf32>
      tpu.vector_store %arg6[%c0_16, %c0_17], %32 {strides = array<i32>} : memref<30x14xf32, #tpu.memory_space<vmem>>, vector<30x14xf32>,
      %cst_18 = arith.constant 0.000000e+00 : f32
      %34 = vector.broadcast %cst_18 : f32 to vector<32x16xf32>
      %c0_19 = arith.constant 0 : index
      %c0_20 = arith.constant 0 : index
      %35 = vector.load %arg7[%c0_19, %c0_20] : memref<32x16xf32, #tpu.memory_space<vmem>>, vector<32x16xf32>
      tpu.vector_store %arg7[%c0_19, %c0_20], %34 {strides = array<i32>} : memref<32x16xf32, #tpu.memory_space<vmem>>, vector<32x16xf32>,
      %36 = tpu.iota {dimensions = array<i32: 0>} : vector<30x14xi32>
      %c16_i32 = arith.constant 16 : i32
      %c0_i32_21 = arith.constant 0 : i32
      %37 = arith.cmpi eq, %c16_i32, %c0_i32_21 : i32
      %c1_i32_22 = arith.constant 1 : i32
      %38 = arith.select %37, %c1_i32_22, %c16_i32 : i32
      %39 = vector.broadcast %38 : i32 to vector<30x14xi32>
      %40 = arith.remsi %36, %39 : vector<30x14xi32>
      %c0_i32_23 = arith.constant 0 : i32
      %41 = vector.broadcast %c0_i32_23 : i32 to vector<30x14xi32>
      %42 = arith.cmpi ne, %40, %41 : vector<30x14xi32>
      %c0_i32_24 = arith.constant 0 : i32
      %43 = vector.broadcast %c0_i32_24 : i32 to vector<30x14xi32>
      %44 = arith.cmpi slt, %40, %43 : vector<30x14xi32>
      %c0_i32_25 = arith.constant 0 : i32
      %45 = arith.cmpi slt, %38, %c0_i32_25 : i32
      %46 = vector.broadcast %45 : i1 to vector<30x14xi1>
      %47 = vector.broadcast %46 : vector<30x14xi1> to vector<30x14xi1>
      %48 = arith.xori %44, %47 : vector<30x14xi1>
      %49 = arith.andi %48, %42 : vector<30x14xi1>
      %50 = vector.broadcast %38 : i32 to vector<30x14xi32>
      %51 = arith.addi %40, %50 : vector<30x14xi32>
      %52 = arith.select %49, %51, %40 : vector<30x14xi1>, vector<30x14xi32>
      %c14_i32 = arith.constant 14 : i32
      %53 = vector.broadcast %c14_i32 : i32 to vector<30x14xi32>
      %54 = arith.cmpi slt, %52, %53 : vector<30x14xi32>
      %cst_26 = arith.constant 1.000000e+00 : f32
      %cst_27 = arith.constant 0.000000e+00 : f32
      %55 = vector.broadcast %cst_26 : f32 to vector<30x14xf32>
      %56 = vector.broadcast %cst_27 : f32 to vector<30x14xf32>
      %57 = arith.select %54, %55, %56 : vector<30x14xi1>, vector<30x14xf32>
      %c0_28 = arith.constant 0 : index
      %c0_29 = arith.constant 0 : index
      %58 = vector.load %arg8[%c0_28, %c0_29] : memref<30x14xf32, #tpu.memory_space<vmem>>, vector<30x14xf32>
      tpu.vector_store %arg8[%c0_28, %c0_29], %57 {strides = array<i32>} : memref<30x14xf32, #tpu.memory_space<vmem>>, vector<30x14xf32>,
    } else {
    }
    %c0 = arith.constant 0 : index
    %c0_1 = arith.constant 0 : index
    %3 = vector.load %arg2[%c0, %c0_1] : memref<32x16xf32, #tpu.memory_space<vmem>>, vector<32x16xf32>
    %c0_2 = arith.constant 0 : index
    %c0_3 = arith.constant 0 : index
    %4 = vector.load %arg3[%c0_2, %c0_3] : memref<32x16xf32, #tpu.memory_space<vmem>>, vector<32x16xf32>
    %5 = vector.extract_strided_slice %3 {offsets = [2, 0], sizes = [30, 14], strides = [1, 1]} : vector<32x16xf32> to vector<30x14xf32>
    %6 = vector.extract_strided_slice %3 {offsets = [1, 0], sizes = [30, 14], strides = [1, 1]} : vector<32x16xf32> to vector<30x14xf32>
    %7 = arith.subf %5, %6 : vector<30x14xf32>
    %8 = vector.extract_strided_slice %3 {offsets = [0, 2], sizes = [30, 14], strides = [1, 1]} : vector<32x16xf32> to vector<30x14xf32>
    %9 = vector.extract_strided_slice %3 {offsets = [0, 1], sizes = [30, 14], strides = [1, 1]} : vector<32x16xf32> to vector<30x14xf32>
    %10 = arith.subf %8, %9 : vector<30x14xf32>
    %11 = arith.mulf %7, %7 : vector<30x14xf32>
    %12 = arith.mulf %10, %10 : vector<30x14xf32>
    %13 = arith.addf %11, %12 : vector<30x14xf32>
    %c0_4 = arith.constant 0 : index
    %c0_5 = arith.constant 0 : index
    %14 = vector.load %arg6[%c0_4, %c0_5] : memref<30x14xf32, #tpu.memory_space<vmem>>, vector<30x14xf32>
    %c0_6 = arith.constant 0 : index
    %c0_7 = arith.constant 0 : index
    %15 = vector.load %arg8[%c0_6, %c0_7] : memref<30x14xf32, #tpu.memory_space<vmem>>, vector<30x14xf32>
    %cst = arith.constant 9.99999993E-9 : f32
    %16 = vector.broadcast %cst : f32 to vector<30x14xf32>
    %17 = arith.addf %13, %16 : vector<30x14xf32>
    %18 = math.sqrt %17 : vector<30x14xf32>
    %19 = arith.mulf %15, %18 : vector<30x14xf32>
    %20 = arith.addf %14, %19 : vector<30x14xf32>
    %c0_8 = arith.constant 0 : index
    %c0_9 = arith.constant 0 : index
    %21 = vector.load %arg6[%c0_8, %c0_9] : memref<30x14xf32, #tpu.memory_space<vmem>>, vector<30x14xf32>
    tpu.vector_store %arg6[%c0_8, %c0_9], %20 {strides = array<i32>} : memref<30x14xf32, #tpu.memory_space<vmem>>, vector<30x14xf32>,
    %c0_10 = arith.constant 0 : index
    %c0_11 = arith.constant 0 : index
    %22 = vector.load %arg7[%c0_10, %c0_11] : memref<32x16xf32, #tpu.memory_space<vmem>>, vector<32x16xf32>
    %23 = arith.subf %4, %3 : vector<32x16xf32>
    %24 = arith.subf %23, %3 : vector<32x16xf32>
    %25 = arith.mulf %4, %24 : vector<32x16xf32>
    %26 = arith.addf %3, %25 : vector<32x16xf32>
    %27 = arith.addf %22, %26 : vector<32x16xf32>
    %c0_12 = arith.constant 0 : index
    %c0_13 = arith.constant 0 : index
    %28 = vector.load %arg7[%c0_12, %c0_13] : memref<32x16xf32, #tpu.memory_space<vmem>>, vector<32x16xf32>
    tpu.vector_store %arg7[%c0_12, %c0_13], %27 {strides = array<i32>} : memref<32x16xf32, #tpu.memory_space<vmem>>, vector<32x16xf32>,
    %c1_i32 = arith.constant 1 : i32
    %29 = arith.cmpi eq, %arg1, %c1_i32 : i32
    %30 = arith.extui %29 : i1 to i32
    %c0_i32_14 = arith.constant 0 : i32
    %31 = arith.cmpi ne, %30, %c0_i32_14 : i32
    scf.if %31 {
      %c0_15 = arith.constant 0 : index
      %c0_16 = arith.constant 0 : index
      %32 = vector.load %arg6[%c0_15, %c0_16] : memref<30x14xf32, #tpu.memory_space<vmem>>, vector<30x14xf32>
      %33 = vector.shape_cast %32 : vector<30x14xf32> to vector<1x30x14xf32>
      %cst_17 = arith.constant dense<0.000000e+00> : vector<1xf32>
      %34 = vector.multi_reduction <add>, %33, %cst_17 [1, 2] : vector<1x30x14xf32> to vector<1xf32>
      %35 = vector.shape_cast %34 : vector<1xf32> to vector<1x1x1xf32>
      %36 = vector.extract %35[0, 0, 0] : f32 from vector<1x1x1xf32>
      %37 = vector.broadcast %36 : f32 to vector<1x8x128xf32>
      %c0_18 = arith.constant 0 : index
      %c0_19 = arith.constant 0 : index
      %c0_20 = arith.constant 0 : index
      %38 = vector.load %arg4[%c0_18, %c0_19, %c0_20] : memref<1x8x128xf32, #tpu.memory_space<vmem>>, vector<1x8x128xf32>
      tpu.vector_store %arg4[%c0_18, %c0_19, %c0_20], %37 {strides = array<i32>} : memref<1x8x128xf32, #tpu.memory_space<vmem>>, vector<1x8x128xf32>,
      %c0_21 = arith.constant 0 : index
      %c0_22 = arith.constant 0 : index
      %39 = vector.load %arg7[%c0_21, %c0_22] : memref<32x16xf32, #tpu.memory_space<vmem>>, vector<32x16xf32>
      %40 = vector.shape_cast %39 : vector<32x16xf32> to vector<1x32x16xf32>
      %cst_23 = arith.constant dense<0.000000e+00> : vector<1xf32>
      %41 = vector.multi_reduction <add>, %40, %cst_23 [1, 2] : vector<1x32x16xf32> to vector<1xf32>
      %42 = vector.shape_cast %41 : vector<1xf32> to vector<1x1x1xf32>
      %43 = vector.extract %42[0, 0, 0] : f32 from vector<1x1x1xf32>
      %44 = vector.broadcast %43 : f32 to vector<1x8x128xf32>
      %c0_24 = arith.constant 0 : index
      %c0_25 = arith.constant 0 : index
      %c0_26 = arith.constant 0 : index
      %45 = vector.load %arg5[%c0_24, %c0_25, %c0_26] : memref<1x8x128xf32, #tpu.memory_space<vmem>>, vector<1x8x128xf32>
      tpu.vector_store %arg5[%c0_24, %c0_25, %c0_26], %44 {strides = array<i32>} : memref<1x8x128xf32, #tpu.memory_space<vmem>>, vector<1x8x128xf32>,
    } else {
    }
    return
  }
  func.func @transform_0(%arg0: i32, %arg1: i32) -> (i32, i32) {
    %c2_i32 = arith.constant 2 : i32
    %0 = arith.muli %arg0, %c2_i32 : i32
    %1 = arith.addi %0, %arg1 : i32
    %c0_i32 = arith.constant 0 : i32
    %c0_i32_0 = arith.constant 0 : i32
    return %1, %c0_i32 : i32, i32
  }
  func.func @transform_1(%arg0: i32, %arg1: i32) -> (i32, i32) {
    %c2_i32 = arith.constant 2 : i32
    %0 = arith.muli %arg0, %c2_i32 : i32
    %1 = arith.addi %0, %arg1 : i32
    %c0_i32 = arith.constant 0 : i32
    %c0_i32_0 = arith.constant 0 : i32
    return %1, %c0_i32 : i32, i32
  }
  func.func @transform_2(%arg0: i32, %arg1: i32) -> (i32, i32, i32) {
    %c0_i32 = arith.constant 0 : i32
    %c0_i32_0 = arith.constant 0 : i32
    %c0_i32_1 = arith.constant 0 : i32
    return %arg0, %c0_i32, %c0_i32_0 : i32, i32, i32
  }
  func.func @transform_3(%arg0: i32, %arg1: i32) -> (i32, i32, i32) {
    %c0_i32 = arith.constant 0 : i32
    %c0_i32_0 = arith.constant 0 : i32
    %c0_i32_1 = arith.constant 0 : i32
    return %arg0, %c0_i32, %c0_i32_0 : i32, i32, i32
  }
}

</mosaic_0001>

<llo_original>
// kernel: tpu_custom_call.1
$region0: #{tpu_custom_call.1}
  #allocation0 [shape = 'u32[]', space=smem, size = 0x4, offset = 0x4, fixed_abs, tag = 'smem constant byte address 0x4 - core index']
  #allocation1 [shape = 'u32[144,128]{1,0:T(1,128)}', space=vmem, size = 0x12000, scoped, tag = 'internal scratch']
  #allocation2 [shape = 'f32[30,14]{1,0:T(8,128)}', space=vmem, size = 0x4000, scoped, tag = 'scratch operand']
  #allocation3 [shape = 'f32[32,16]{1,0:T(8,128)}', space=vmem, size = 0x4000, scoped, tag = 'scratch operand']
  #allocation4 [shape = 'f32[30,14]{1,0:T(8,128)}', space=vmem, size = 0x4000, scoped, tag = 'scratch operand']
  %s0 = inlined_call_operand.vmem [shape: f32[128,16], index: 0, kind: input, shape index: {}]
  %s1 = inlined_call_operand.vmem [shape: f32[128,16], index: 1, kind: input, shape index: {}]
  %s2 = inlined_call_operand.hbm [shape: f32[2,8,128], index: 2, kind: output, shape index: {0}]
  %s3 = inlined_call_operand.hbm [shape: f32[2,8,128], index: 3, kind: output, shape index: {1}]
  %4 = xla_tuple %s2, %s3
  %s5 = sld [smem:[#allocation0]]
  $region57: #{tpu_custom_call.1} parent=0
    _
  %s7 = ssub.s32 1, %s5
  %s8 = scalar_select 0, %s7, %s5
  $region1: #{tpu_custom_call.1} parent=0
    #allocation5 [shape = 'u8[8192]{0}', space=vmem, size = 0x2000, scoped, tag = 'output window, operand 0']
    #allocation6 [shape = 's32[2]{0}', space=sflag, size = 0x8, scoped, tag = 'scoped memory for tpu_custom_call.1']
    #allocation7 [shape = 'u8[8192]{0}', space=vmem, size = 0x2000, scoped, tag = 'output window, operand 1']
    #allocation8 [shape = 's32[2]{0}', space=sflag, size = 0x8, scoped, tag = 'scoped memory for tpu_custom_call.1']
    %9 = vsyncpa [#allocation6], 0
    %s10 = scalar_lea.sflag [#allocation6], 1
    %11 = vsyncpa %s10, 0
    %12 = vsyncpa [#allocation8], 0
    %s13 = scalar_lea.sflag [#allocation8], 1
    %14 = vsyncpa %s13, 0
    loop: start=0, step=1, limit=6
    $region2: #{tpu_custom_call.1} parent=1 // loop_pre_header
      _
    $region3: #{tpu_custom_call.1} parent=1 // loop_header
      %s16 = sphi 0, %s20
      %p17 = scmp.ge.s32.totalorder %s16, 6
      %s23 = sphi 0, %s35
      %s24 = sphi 0, %s31
      %s25 = sphi 0, %s23
      %s26 = sphi 0, %s24
      %s27 = sphi 0, %s25
      %s28 = sphi 0, %s26
      %s42 = sphi 0, %s44
      %s45 = sphi 0, %s42
      %s46 = sphi 0, %s45
      %s62 = sphi 0, %s46
      %s72 = sphi 0, %s74
      %s75 = sphi 0, %s72
      %s76 = sphi 0, %s75
      %s92 = sphi 0, %s76
      %s98 = sphi 0, %s100
      %s101 = sphi 0, %s98
      %s102 = sphi 0, %s101
      %s118 = sphi 0, %s102
      %s124 = sphi 0, %s126
      %s127 = sphi 0, %s124
      %s128 = sphi 0, %s127
      %s144 = sphi 0, %s128
    $region4: #{tpu_custom_call.1} parent=1 // loop_header_branch
      %19 = sbr.rel (%p17) target = $region8
    $region5: #{tpu_custom_call.1} parent=1 // loop_body
      %s21 = ssub.s32 %s16, 1
      %s22 = ssub.s32 %s16, 2
      %s29 = sadd.s32 1, %s24
      %p30 = scmp.ge.s32.totalorder %s29, 2
      %s31 = scalar_select %p30, 0, %s29
      %s32 = sadd.s32 1, %s23
      %s33 = scalar_select %p30, %s32, %s23
      %p34 = scmp.ge.s32.totalorder %s33, 2
      %s35 = scalar_select %p34, 0, %s33
      %s36 = smul.u32 %s23, 2
      %s37 = sadd.s32 %s36, %s24
      %s38 = smul.u32 %s35, 2
      %s39 = sadd.s32 %s38, %s31
      %s40 = ssub.s32 %s37, %s39
      %p41 = scmp.eq.s32.totalorder %s40, 0
      %s43 = sadd.s32 %s42, 1
      %s44 = scalar_select %p41, %s42, %s43
      %p47 = pneg %p41
      %p48 = scmp.eq.s32.totalorder %s16, 3
      %p49 = por %p47, %p48
      %p50 = scmp.ne.s32.totalorder %s42, %s45
      %p51 = scmp.eq.s32.totalorder %s16, 0
      %p52 = por %p50, %p51
      %p53 = scmp.ne.s32.totalorder %s42, %s45
      %p54 = scmp.eq.s32.totalorder %s21, 3
      %p55 = por %p53, %p54
      %p56 = scmp.ne.s32.totalorder %s45, %s46
      %p57 = scmp.eq.s32.totalorder %s21, 0
      %p58 = por %p56, %p57
      %p59 = scmp.ne.s32.totalorder %s45, %s46
      %p60 = scmp.eq.s32.totalorder %s22, 3
      %p61 = por %p59, %p60
      %p63 = scmp.ne.s32.totalorder %s46, %s62
      %p64 = scmp.eq.s32.totalorder %s22, 0
      %p65 = por %p63, %p64
      %s66 = smul.u32 %s23, 2
      %s67 = sadd.s32 %s66, %s24
      %s68 = smul.u32 %s35, 2
      %s69 = sadd.s32 %s68, %s31
      %s70 = ssub.s32 %s67, %s69
      %p71 = scmp.eq.s32.totalorder %s70, 0
      %s73 = sadd.s32 %s72, 1
      %s74 = scalar_select %p71, %s72, %s73
      %p77 = pneg %p71
      %p78 = scmp.eq.s32.totalorder %s16, 3
      %p79 = por %p77, %p78
      %p80 = scmp.ne.s32.totalorder %s72, %s75
      %p81 = scmp.eq.s32.totalorder %s16, 0
      %p82 = por %p80, %p81
      %p83 = scmp.ne.s32.totalorder %s72, %s75
      %p84 = scmp.eq.s32.totalorder %s21, 3
      %p85 = por %p83, %p84
      %p86 = scmp.ne.s32.totalorder %s75, %s76
      %p87 = scmp.eq.s32.totalorder %s21, 0
      %p88 = por %p86, %p87
      %p89 = scmp.ne.s32.totalorder %s75, %s76
      %p90 = scmp.eq.s32.totalorder %s22, 3
      %p91 = por %p89, %p90
      %p93 = scmp.ne.s32.totalorder %s76, %s92
      %p94 = scmp.eq.s32.totalorder %s22, 0
      %p95 = por %p93, %p94
      %s96 = ssub.s32 %s23, %s35
      %p97 = scmp.eq.s32.totalorder %s96, 0
      %s99 = sadd.s32 %s98, 1
      %s100 = scalar_select %p97, %s98, %s99
      %p103 = pneg %p97
      %p104 = scmp.eq.s32.totalorder %s16, 3
      %p105 = por %p103, %p104
      %p106 = scmp.ne.s32.totalorder %s98, %s101
      %p107 = scmp.eq.s32.totalorder %s16, 0
      %p108 = por %p106, %p107
      %p109 = scmp.ne.s32.totalorder %s98, %s101
      %p110 = scmp.eq.s32.totalorder %s21, 3
      %p111 = por %p109, %p110
      %p112 = scmp.ne.s32.totalorder %s101, %s102
      %p113 = scmp.eq.s32.totalorder %s21, 0
      %p114 = por %p112, %p113
      %p115 = scmp.ne.s32.totalorder %s101, %s102
      %p116 = scmp.eq.s32.totalorder %s22, 3
      %p117 = por %p115, %p116
      %p119 = scmp.ne.s32.totalorder %s102, %s118
      %p120 = scmp.eq.s32.totalorder %s22, 0
      %p121 = por %p119, %p120
      %s122 = ssub.s32 %s23, %s35
      %p123 = scmp.eq.s32.totalorder %s122, 0
      %s125 = sadd.s32 %s124, 1
      %s126 = scalar_select %p123, %s124, %s125
      %p129 = pneg %p123
      %p130 = scmp.eq.s32.totalorder %s16, 3
      %p131 = por %p129, %p130
      %p132 = scmp.ne.s32.totalorder %s124, %s127
      %p133 = scmp.eq.s32.totalorder %s16, 0
      %p134 = por %p132, %p133
      %p135 = scmp.ne.s32.totalorder %s124, %s127
      %p136 = scmp.eq.s32.totalorder %s21, 3
      %p137 = por %p135, %p136
      %p138 = scmp.ne.s32.totalorder %s127, %s128
      %p139 = scmp.eq.s32.totalorder %s21, 0
      %p140 = por %p138, %p139
      %p141 = scmp.ne.s32.totalorder %s127, %s128
      %p142 = scmp.eq.s32.totalorder %s22, 3
      %p143 = por %p141, %p142
      %p145 = scmp.ne.s32.totalorder %s128, %s144
      %p146 = scmp.eq.s32.totalorder %s22, 0
      %p147 = por %p145, %p146
      %p148 = scmp.le.s32.totalorder 1, %s16
      %p149 = scmp.lt.s32.totalorder %s16, 5
      %p150 = pnand %p148, %p149
      %p151 = pneg %p150
      // Predicated region
      $region9: #{tpu_custom_call.1} parent=5 // pred_check
        _
      $region10: #{tpu_custom_call.1} parent=5 // pred_check_branch
        %153 = sbr.rel (%p150) target = $region12
      $region11: #{tpu_custom_call.1} parent=5 // pred_region
        %s154 = ssub.s32 %s16, 1
      $region12: #{tpu_custom_call.1} parent=5 // pred_fallthru
        _
      %p155 = scmp.lt.s32.totalorder %s16, 4
      // Predicated region
      $region13: #{tpu_custom_call.1} parent=5 // pred_check
        %p156 = pneg %p155
      $region14: #{tpu_custom_call.1} parent=5 // pred_check_branch
        %158 = sbr.rel (%p156) target = $region16
      $region15: #{tpu_custom_call.1} parent=5 // pred_region
        // Predicated region
        $region17: #{tpu_custom_call.1} parent=15 // pred_check
          %p159 = pneg %p52
        $region18: #{tpu_custom_call.1} parent=15 // pred_check_branch
          %161 = sbr.rel (%p159) target = $region20
        $region19: #{tpu_custom_call.1} parent=15 // pred_region
          %s162 = smul.u32 %s23, 2
          %s163 = sadd.s32 %s162, %s24
          %s164 = smul.u32 4, %s163
          %p165 = scmp.lt.s32.totalorder %s164, 15
          %s166 = scalar_select %p165, %s164, 15
          %s167 = smul.addr %s166, 8
          %s168 = scalar_lea.vmem %s0, %s167
          %s169 = smul.u32 %s23, 2
          %s170 = sadd.s32 %s169, %s24
          %s171 = smul.u32 4, %s170
        $region20: #{tpu_custom_call.1} parent=15 // pred_fallthru
          _
        // Predicated region
        $region21: #{tpu_custom_call.1} parent=15 // pred_check
          %p172 = pneg %p82
        $region22: #{tpu_custom_call.1} parent=15 // pred_check_branch
          %174 = sbr.rel (%p172) target = $region24
        $region23: #{tpu_custom_call.1} parent=15 // pred_region
          %s175 = smul.u32 %s23, 2
          %s176 = sadd.s32 %s175, %s24
          %s177 = smul.u32 4, %s176
          %p178 = scmp.lt.s32.totalorder %s177, 15
          %s179 = scalar_select %p178, %s177, 15
          %s180 = smul.addr %s179, 8
          %s181 = scalar_lea.vmem %s1, %s180
          %s182 = smul.u32 %s23, 2
          %s183 = sadd.s32 %s182, %s24
          %s184 = smul.u32 4, %s183
        $region24: #{tpu_custom_call.1} parent=15 // pred_fallthru
          _
      $region16: #{tpu_custom_call.1} parent=5 // pred_fallthru
        _
      %p185 = scmp.le.s32.totalorder 1, %s16
      %p186 = scmp.lt.s32.totalorder %s16, 5
      %p187 = pnand %p185, %p186
      %p188 = pneg %p187
      // Predicated region
      $region25: #{tpu_custom_call.1} parent=5 // pred_check
        _
      $region26: #{tpu_custom_call.1} parent=5 // pred_check_branch
        %190 = sbr.rel (%p187) target = $region28
      $region27: #{tpu_custom_call.1} parent=5 // pred_region
        %s191 = ssub.s32 %s16, 1
        %s192 = smul.u32 %s25, 2
        %s193 = sadd.s32 %s192, %s26
        %s194 = smul.u32 4, %s193
        %p195 = scmp.lt.s32.totalorder %s194, 15
        %s196 = scalar_select %p195, %s194, 15
        %s197 = smul.addr %s196, 8
        %s198 = scalar_lea.vmem %s0, %s197
        %p199 = pneg %p58
        %p200 = pneg %p55
        %s201 = smul.u32 %s25, 2
        %s202 = sadd.s32 %s201, %s26
        %s203 = smul.u32 4, %s202
        %p204 = scmp.lt.s32.totalorder %s203, 15
        %s205 = scalar_select %p204, %s203, 15
        %s206 = smul.addr %s205, 8
        %s207 = scalar_lea.vmem %s1, %s206
        %p208 = pneg %p88
        %p209 = pneg %p85
        %p210 = pneg %p114
        %p211 = pneg %p111
        %s212 = sand.u32 %s101, 1
        %s213 = scalar_lea.sflag [#allocation6], %s212
        %s214 = sand.u32 %s101, 1
        %s215 = smul.addr %s214, 8
        %s216 = scalar_lea.vmem [#allocation5], %s215
        %p217 = pneg %p140
        %p218 = pneg %p137
        %s219 = sand.u32 %s127, 1
        %s220 = scalar_lea.sflag [#allocation8], %s219
        %s221 = sand.u32 %s127, 1
        %s222 = smul.addr %s221, 8
        %s223 = scalar_lea.vmem [#allocation7], %s222
        %s224 = smul.u32 %s25, 2
        %s225 = sadd.s32 %s224, %s26
        %s226 = smul.u32 4, %s225
        %p227 = scmp.lt.s32.totalorder %s226, 15
        %s228 = scalar_select %p227, %s226, 15
        %s229 = smul.addr %s228, 8
        %s230 = scalar_lea.vmem %s0, %s229
        %s231 = smul.u32 %s25, 2
        %s232 = sadd.s32 %s231, %s26
        %s233 = smul.u32 4, %s232
        %s234 = smul.u32 %s25, 2
        %s235 = sadd.s32 %s234, %s26
        %s236 = smul.u32 4, %s235
        %p237 = scmp.lt.s32.totalorder %s236, 15
        %s238 = scalar_select %p237, %s236, 15
        %s239 = smul.addr %s238, 8
        %s240 = scalar_lea.vmem %s1, %s239
        %s241 = smul.u32 %s25, 2
        %s242 = sadd.s32 %s241, %s26
        %s243 = smul.u32 4, %s242
        %p244 = scmp.eq.s32.totalorder %s26, 0
        // Predicated region
        $region29: #{tpu_custom_call.1} parent=27 // pred_check
          %p245 = pneg %p244
        $region30: #{tpu_custom_call.1} parent=27 // pred_check_branch
          %247 = sbr.rel (%p245) target = $region32
        $region31: #{tpu_custom_call.1} parent=27 // pred_region
          %vm248 = vcmask 113664
          %249 = vst.msk [vmem:[#allocation2] sm:$0xff] %vm248, 0.0
          %250 = vst.msk [vmem:[#allocation2 + $0x8] sm:$0xff] %vm248, 0.0
          %251 = vst.msk [vmem:[#allocation2 + $0x10] sm:$0xff] %vm248, 0.0
          %vm252 = vcmask 111616
          %253 = vst.msk [vmem:[#allocation2 + $0x18] sm:$0x3f] %vm252, 0.0
          %vm254 = vcmask 130048
          %255 = vst.msk [vmem:[#allocation3] sm:$0xff] %vm254, 0.0
          %256 = vst.msk [vmem:[#allocation3 + $0x8] sm:$0xff] %vm254, 0.0
          %257 = vst.msk [vmem:[#allocation3 + $0x10] sm:$0xff] %vm254, 0.0
          %258 = vst.msk [vmem:[#allocation3 + $0x18] sm:$0xff] %vm254, 0.0
          %v259 = vlaneseq
          %v260 = vshrl.u32 %v259, 7
          %v261 = vadd.s32 %v260, 8
          %v262 = vadd.s32 %v260, 16
          %v263 = vadd.s32 %v260, 24
          %vm264 = vcmp.lt.s32.totalorder %v260, 0
          %v265 = vsub.s32 0, %v260
          %v266 = vsel %vm264, %v265, %v260
          %v267 = vshrl.u32 %v266, 4
          %v268 = vand.u32 %v266, 15
          %v269 = vsub.s32 0, %v268
          %v270 = vsel %vm264, %v269, %v268
          %vm271 = vcmp.lt.s32.totalorder %v261, 0
          %v272 = vsub.s32 0, %v261
          %v273 = vsel %vm271, %v272, %v261
          %v274 = vshrl.u32 %v273, 4
          %v275 = vand.u32 %v273, 15
          %v276 = vsub.s32 0, %v275
          %v277 = vsel %vm271, %v276, %v275
          %vm278 = vcmp.lt.s32.totalorder %v262, 0
          %v279 = vsub.s32 0, %v262
          %v280 = vsel %vm278, %v279, %v262
          %v281 = vshrl.u32 %v280, 4
          %v282 = vand.u32 %v280, 15
          %v283 = vsub.s32 0, %v282
          %v284 = vsel %vm278, %v283, %v282
          %vm285 = vcmp.lt.s32.totalorder %v263, 0
          %v286 = vsub.s32 0, %v263
          %v287 = vsel %vm285, %v286, %v263
          %v288 = vshrl.u32 %v287, 4
          %v289 = vand.u32 %v287, 15
          %v290 = vsub.s32 0, %v289
          %v291 = vsel %vm285, %v290, %v289
          %vm292 = vcmp.ne.s32.totalorder %v270, 0
          %vm293 = vcmp.ne.s32.totalorder %v277, 0
          %vm294 = vcmp.ne.s32.totalorder %v284, 0
          %vm295 = vcmp.ne.s32.totalorder %v291, 0
          %vm296 = vcmp.lt.s32.totalorder %v270, 0
          %vm297 = vcmp.lt.s32.totalorder %v277, 0
          %vm298 = vcmp.lt.s32.totalorder %v284, 0
          %vm299 = vcmp.lt.s32.totalorder %v291, 0
          %vm300 = vmand %vm296, %vm292
          %vm301 = vmand %vm297, %vm293
          %vm302 = vmand %vm298, %vm294
          %vm303 = vmand %vm299, %vm295
          %v304 = vadd.s32 %v270, 16
          %v305 = vadd.s32 %v277, 16
          %v306 = vadd.s32 %v284, 16
          %v307 = vadd.s32 %v291, 16
          %v308 = vsel %vm300, %v304, %v270
          %v309 = vsel %vm301, %v305, %v277
          %v310 = vsel %vm302, %v306, %v284
          %v311 = vsel %vm303, %v307, %v291
          %vm312 = vcmp.lt.s32.totalorder %v308, 14
          %vm313 = vcmp.lt.s32.totalorder %v309, 14
          %vm314 = vcmp.lt.s32.totalorder %v310, 14
          %vm315 = vcmp.lt.s32.totalorder %v311, 14
          %v316 = vsel %vm312, 1.0, 0.0
          %v317 = vsel %vm313, 1.0, 0.0
          %v318 = vsel %vm314, 1.0, 0.0
          %v319 = vsel %vm315, 1.0, 0.0
          %320 = vst.msk [vmem:[#allocation4] sm:$0xff] %vm248, %v316
          %321 = vst.msk [vmem:[#allocation4 + $0x8] sm:$0xff] %vm248, %v317
          %322 = vst.msk [vmem:[#allocation4 + $0x10] sm:$0xff] %vm248, %v318
          %323 = vst.msk [vmem:[#allocation4 + $0x18] sm:$0x3f] %vm252, %v319
        $region32: #{tpu_custom_call.1} parent=27 // pred_fallthru
          _
        %v324 = vld [vmem:[%s230] sm:$0xff]
        %v325 = vld [vmem:[%s230 + $0x8] sm:$0xff]
        %v326 = vld [vmem:[%s230 + $0x10] sm:$0xff]
        %v327 = vld [vmem:[%s230 + $0x18] sm:$0xff]
        %v328 = vld [vmem:[%s240] sm:$0xff]
        %v329 = vld [vmem:[%s240 + $0x8] sm:$0xff]
        %v330 = vld [vmem:[%s240 + $0x10] sm:$0xff]
        %v331 = vld [vmem:[%s240 + $0x18] sm:$0xff]
        %vm336 = vcmask 1040384
        %v337 = vrot.slane %v324, 7
        %v338 = vrot.slane %v325, 7
        %v339 = vsel %vm336, %v337, %v338
        %v340 = vrot.slane %v326, 7
        %v341 = vsel %vm336, %v338, %v340
        %v342 = vrot.slane %v327, 7
        %v343 = vsel %vm336, %v340, %v342
        %v348 = vsub.f32 %v324, %v337
        %v349 = vsub.f32 %v325, %v339
        %v350 = vsub.f32 %v326, %v341
        %v351 = vsub.f32 %v327, %v343
        %352 = vrot.lane.b32.xlu0 %v324, 1
        %v353 = vpop.permute.xlu0 %352
        %354 = vrot.lane.b32.xlu0 %v325, 1
        %v355 = vpop.permute.xlu0 %354
        %356 = vrot.lane.b32.xlu0 %v326, 1
        %v357 = vpop.permute.xlu0 %356
        %358 = vrot.lane.b32.xlu0 %v327, 1
        %v359 = vpop.permute.xlu0 %358
        %v364 = vsub.f32 %v324, %v353
        %v365 = vsub.f32 %v325, %v355
        %v366 = vsub.f32 %v326, %v357
        %v367 = vsub.f32 %v327, %v359
        %v368 = vmul.f32 %v348, %v348
        %v369 = vmul.f32 %v349, %v349
        %v370 = vmul.f32 %v350, %v350
        %v371 = vmul.f32 %v351, %v351
        %v372 = vmul.f32 %v364, %v364
        %v373 = vmul.f32 %v365, %v365
        %v374 = vmul.f32 %v366, %v366
        %v375 = vmul.f32 %v367, %v367
        %vm380 = vcmask 1041408
        %v381 = vrot.slane %v372, 6
        %v382 = vrot.slane %v373, 6
        %v383 = vsel %vm380, %v381, %v382
        %v384 = vrot.slane %v374, 6
        %v385 = vsel %vm380, %v382, %v384
        %v386 = vrot.slane %v375, 6
        %v387 = vsel %vm380, %v384, %v386
        %388 = vrot.lane.b32.xlu0 %v381, 126
        %v389 = vpop.permute.xlu0 %388
        %390 = vrot.lane.b32.xlu0 %v383, 126
        %v391 = vpop.permute.xlu0 %390
        %392 = vrot.lane.b32.xlu0 %v385, 126
        %v393 = vpop.permute.xlu0 %392
        %394 = vrot.lane.b32.xlu0 %v387, 126
        %v395 = vpop.permute.xlu0 %394
        %v400 = vadd.f32 %v368, %v389
        %v401 = vadd.f32 %v369, %v391
        %v402 = vadd.f32 %v370, %v393
        %v403 = vadd.f32 %v371, %v395
        %v404 = vld [vmem:[#allocation2] sm:$0xff]
        %v405 = vld [vmem:[#allocation2 + $0x8] sm:$0xff]
        %v406 = vld [vmem:[#allocation2 + $0x10] sm:$0xff]
        %v407 = vld [vmem:[#allocation2 + $0x18] sm:$0x3f]
        %v408 = vld [vmem:[#allocation4] sm:$0xff]
        %v409 = vld [vmem:[#allocation4 + $0x8] sm:$0xff]
        %v410 = vld [vmem:[#allocation4 + $0x10] sm:$0xff]
        %v411 = vld [vmem:[#allocation4 + $0x18] sm:$0x3f]
        %v412 = vadd.f32 %v400, 1e-08
        %v413 = vadd.f32 %v401, 1e-08
        %v414 = vadd.f32 %v402, 1e-08
        %v415 = vadd.f32 %v403, 1e-08
        %v416 = vrsqrt.pop %v412
        %v417 = vmul.f32 %v412, %v416
        %vm418 = vcmp.eq.f32.partialorder %v412, inf
        %v419 = vsel %vm418, %v412, %v417
        %vm420 = vcmp.eq.f32.partialorder %v412, 0.0
        %v421 = vand.u32 %v412, 2147483648
        %v422 = vsel %vm420, %v421, %v419
        %v423 = vrsqrt.pop %v413
        %v424 = vmul.f32 %v413, %v423
        %vm425 = vcmp.eq.f32.partialorder %v413, inf
        %v426 = vsel %vm425, %v413, %v424
        %vm427 = vcmp.eq.f32.partialorder %v413, 0.0
        %v428 = vand.u32 %v413, 2147483648
        %v429 = vsel %vm427, %v428, %v426
        %v430 = vrsqrt.pop %v414
        %v431 = vmul.f32 %v414, %v430
        %vm432 = vcmp.eq.f32.partialorder %v414, inf
        %v433 = vsel %vm432, %v414, %v431
        %vm434 = vcmp.eq.f32.partialorder %v414, 0.0
        %v435 = vand.u32 %v414, 2147483648
        %v436 = vsel %vm434, %v435, %v433
        %v437 = vrsqrt.pop %v415
        %v438 = vmul.f32 %v415, %v437
        %vm439 = vcmp.eq.f32.partialorder %v415, inf
        %v440 = vsel %vm439, %v415, %v438
        %vm441 = vcmp.eq.f32.partialorder %v415, 0.0
        %v442 = vand.u32 %v415, 2147483648
        %v443 = vsel %vm441, %v442, %v440
        %vm448 = vcmask 1045504
        %v449 = vrot.slane %v422, 2
        %v450 = vrot.slane %v429, 2
        %v451 = vsel %vm448, %v449, %v450
        %v452 = vrot.slane %v436, 2
        %v453 = vsel %vm448, %v450, %v452
        %v454 = vrot.slane %v443, 2
        %v455 = vsel %vm448, %v452, %v454
        %v460 = vmul.f32 %v408, %v451
        %v461 = vmul.f32 %v409, %v453
        %v462 = vmul.f32 %v410, %v455
        %v463 = vmul.f32 %v411, %v454
        %v464 = vadd.f32 %v404, %v460
        %v465 = vadd.f32 %v405, %v461
        %v466 = vadd.f32 %v406, %v462
        %v467 = vadd.f32 %v407, %v463
        %vm468 = vcmask 113664
        %469 = vst.msk [vmem:[#allocation2] sm:$0xff] %vm468, %v464
        %470 = vst.msk [vmem:[#allocation2 + $0x8] sm:$0xff] %vm468, %v465
        %471 = vst.msk [vmem:[#allocation2 + $0x10] sm:$0xff] %vm468, %v466
        %vm472 = vcmask 111616
        %473 = vst.msk [vmem:[#allocation2 + $0x18] sm:$0x3f] %vm472, %v467
        %v474 = vld [vmem:[#allocation3] sm:$0xff]
        %v475 = vld [vmem:[#allocation3 + $0x8] sm:$0xff]
        %v476 = vld [vmem:[#allocation3 + $0x10] sm:$0xff]
        %v477 = vld [vmem:[#allocation3 + $0x18] sm:$0xff]
        %v478 = vsub.f32 %v328, %v324
        %v479 = vsub.f32 %v329, %v325
        %v480 = vsub.f32 %v330, %v326
        %v481 = vsub.f32 %v331, %v327
        %v482 = vsub.f32 %v478, %v324
        %v483 = vsub.f32 %v479, %v325
        %v484 = vsub.f32 %v480, %v326
        %v485 = vsub.f32 %v481, %v327
        %v486 = vmul.f32 %v328, %v482
        %v487 = vmul.f32 %v329, %v483
        %v488 = vmul.f32 %v330, %v484
        %v489 = vmul.f32 %v331, %v485
        %v490 = vadd.f32 %v324, %v486
        %v491 = vadd.f32 %v325, %v487
        %v492 = vadd.f32 %v326, %v488
        %v493 = vadd.f32 %v327, %v489
        %v494 = vadd.f32 %v474, %v490
        %v495 = vadd.f32 %v475, %v491
        %v496 = vadd.f32 %v476, %v492
        %v497 = vadd.f32 %v477, %v493
        %vm498 = vcmask 130048
        %499 = vst.msk [vmem:[#allocation3] sm:$0xff] %vm498, %v494
        %500 = vst.msk [vmem:[#allocation3 + $0x8] sm:$0xff] %vm498, %v495
        %501 = vst.msk [vmem:[#allocation3 + $0x10] sm:$0xff] %vm498, %v496
        %502 = vst.msk [vmem:[#allocation3 + $0x18] sm:$0xff] %vm498, %v497
        %p503 = scmp.eq.s32.totalorder %s26, 1
        // Predicated region
        $region33: #{tpu_custom_call.1} parent=27 // pred_check
          %p504 = pneg %p503
        $region34: #{tpu_custom_call.1} parent=27 // pred_check_branch
          %506 = sbr.rel (%p504) target = $region36
        $region35: #{tpu_custom_call.1} parent=27 // pred_region
          %v507 = vld [vmem:[#allocation2] sm:$0xff]
          %v508 = vld [vmem:[#allocation2 + $0x8] sm:$0xff]
          %v509 = vld [vmem:[#allocation2 + $0x10] sm:$0xff]
          %v510 = vld [vmem:[#allocation2 + $0x18] sm:$0x3f]
          %v511 = vsel %vm468, %v507, 0.0
          %v512 = vsel %vm468, %v508, 0.0
          %v513 = vadd.f32 %v511, %v512
          %v514 = vsel %vm468, %v509, 0.0
          %v515 = vadd.f32 %v513, %v514
          %v516 = vsel %vm472, %v510, 0.0
          %v517 = vadd.f32 %v515, %v516
          %518 = vadd.xlane.f32.xlu0 %v517
          %v519 = vpop.xlane.xlu0 %518
          %v520 = vrot.slane %v519, 4
          %v521 = vadd.f32 %v519, %v520
          %v522 = vrot.slane %v521, 2
          %v523 = vadd.f32 %v521, %v522
          %v524 = vrot.slane %v523, 1
          %v525 = vadd.f32 %v523, %v524
          %s526 = vtos %v525
          %v527 = vstv %s526
          %528 = vst [vmem:[%s216] sm:$0xff] %v527
          %v529 = vld [vmem:[#allocation3] sm:$0xff]
          %v530 = vld [vmem:[#allocation3 + $0x8] sm:$0xff]
          %v531 = vld [vmem:[#allocation3 + $0x10] sm:$0xff]
          %v532 = vld [vmem:[#allocation3 + $0x18] sm:$0xff]
          %v533 = vsel %vm498, %v529, 0.0
          %v534 = vsel %vm498, %v530, 0.0
          %v535 = vadd.f32 %v533, %v534
          %v536 = vsel %vm498, %v531, 0.0
          %v537 = vadd.f32 %v535, %v536
          %v538 = vsel %vm498, %v532, 0.0
          %v539 = vadd.f32 %v537, %v538
          %540 = vadd.xlane.f32.xlu0 %v539
          %v541 = vpop.xlane.xlu0 %540
          %v542 = vrot.slane %v541, 4
          %v543 = vadd.f32 %v541, %v542
          %v544 = vrot.slane %v543, 2
          %v545 = vadd.f32 %v543, %v544
          %v546 = vrot.slane %v545, 1
          %v547 = vadd.f32 %v545, %v546
          %s548 = vtos %v547
          %v549 = vstv %s548
          %550 = vst [vmem:[%s223] sm:$0xff] %v549
        $region36: #{tpu_custom_call.1} parent=27 // pred_fallthru
          _
        %s551 = sand.u32 %s101, 1
        %s552 = scalar_lea.sflag [#allocation6], %s551
        %s553 = sand.u32 %s101, 1
        %s554 = smul.addr %s553, 8
        %s555 = scalar_lea.vmem [#allocation5], %s554
        %s556 = sand.u32 %s127, 1
        %s557 = scalar_lea.sflag [#allocation8], %s556
        %s558 = sand.u32 %s127, 1
        %s559 = smul.addr %s558, 8
        %s560 = scalar_lea.vmem [#allocation7], %s559
        // Predicated region
        $region37: #{tpu_custom_call.1} parent=27 // pred_check
          %p561 = pneg %p111
        $region38: #{tpu_custom_call.1} parent=27 // pred_check_branch
          %563 = sbr.rel (%p561) target = $region40
        $region39: #{tpu_custom_call.1} parent=27 // pred_region
          %s565 = ssub.s32 128, 128
          %566 = vsyncadd %s552, %s565
          %s567 = smul.addr %s25, 128
          %s568 = scalar_lea.hbm %s2, %s567
          %s570 = sshll.u32 %s555, 4
          %s571 = int_to_ptr.vmem [resolvable:$true] %s570
          %573 = dma.vmem_to_hbm [thread:$0]  %s571, 128, %s568, %s552
        $region40: #{tpu_custom_call.1} parent=27 // pred_fallthru
          _
        // Predicated region
        $region41: #{tpu_custom_call.1} parent=27 // pred_check
          %p574 = pneg %p137
        $region42: #{tpu_custom_call.1} parent=27 // pred_check_branch
          %576 = sbr.rel (%p574) target = $region44
        $region43: #{tpu_custom_call.1} parent=27 // pred_region
          %s578 = ssub.s32 128, 128
          %579 = vsyncadd %s557, %s578
          %s580 = smul.addr %s25, 128
          %s581 = scalar_lea.hbm %s3, %s580
          %s583 = sshll.u32 %s560, 4
          %s584 = int_to_ptr.vmem [resolvable:$true] %s583
          %586 = dma.vmem_to_hbm [thread:$0]  %s584, 128, %s581, %s557
        $region44: #{tpu_custom_call.1} parent=27 // pred_fallthru
          _
      $region28: #{tpu_custom_call.1} parent=5 // pred_fallthru
        _
      %p587 = scmp.le.s32.totalorder 2, %s16
      // Predicated region
      $region45: #{tpu_custom_call.1} parent=5 // pred_check
        %p588 = pneg %p587
      $region46: #{tpu_custom_call.1} parent=5 // pred_check_branch
        %590 = sbr.rel (%p588) target = $region48
      $region47: #{tpu_custom_call.1} parent=5 // pred_region
        %s591 = ssub.s32 %s16, 2
        // Predicated region
        $region49: #{tpu_custom_call.1} parent=47 // pred_check
          %p592 = pneg %p117
        $region50: #{tpu_custom_call.1} parent=47 // pred_check_branch
          %594 = sbr.rel (%p592) target = $region52
        $region51: #{tpu_custom_call.1} parent=47 // pred_region
          %s595 = sand.u32 %s102, 1
          %s596 = scalar_lea.sflag [#allocation6], %s595
          %s597 = sand.u32 %s102, 1
          %s598 = smul.addr %s597, 8
          %s599 = scalar_lea.vmem [#allocation5], %s598
          %600 = dma.done %s596, 128
        $region52: #{tpu_custom_call.1} parent=47 // pred_fallthru
          _
        // Predicated region
        $region53: #{tpu_custom_call.1} parent=47 // pred_check
          %p601 = pneg %p143
        $region54: #{tpu_custom_call.1} parent=47 // pred_check_branch
          %603 = sbr.rel (%p601) target = $region56
        $region55: #{tpu_custom_call.1} parent=47 // pred_region
          %s604 = sand.u32 %s128, 1
          %s605 = scalar_lea.sflag [#allocation8], %s604
          %s606 = sand.u32 %s128, 1
          %s607 = smul.addr %s606, 8
          %s608 = scalar_lea.vmem [#allocation7], %s607
          %609 = dma.done %s605, 128
        $region56: #{tpu_custom_call.1} parent=47 // pred_fallthru
          _
      $region48: #{tpu_custom_call.1} parent=5 // pred_fallthru
        _
    $region6: #{tpu_custom_call.1} parent=1 // loop_footer
      %s20 = sadd.s32 1, %s16
    $region7: #{tpu_custom_call.1} parent=1 // loop_footer_branch
      %15 = sbr.rel target = $region3
    $region8: #{tpu_custom_call.1} parent=1 // loop_exit
      _
    %610 = vsyncpa [#allocation6], 1
    %s611 = scalar_lea.sflag [#allocation6], 1
    %612 = vsyncpa %s611, 1
    %613 = vsyncpa [#allocation8], 1
    %s614 = scalar_lea.sflag [#allocation8], 1
    %615 = vsyncpa %s614, 1

</llo_original>
